<compile_context>
chip_gen: v7x
topology: tpu7x:2x2x1
jax: 0.10.0
libtpu: 0.0.40
codegen_flags: <defaults>
</compile_context>

<pallas_src>
import jax
import jax.numpy as jnp
from jax.experimental import pallas as pl
from jax.experimental.pallas import tpu as pltpu

EPS = 1e-5

# Total bytes for the double-buffered input tiles (2 buffers together).
_INPUT_VMEM_BUDGET_BYTES = 24 << 20
# Explicit scoped-VMEM limit: well above actual use (~25 MiB) and inside
# v7x's 64 MiB physical VMEM / v5e's 128 MiB physical.
_VMEM_LIMIT_BYTES = 48 << 20


def _round_down(v, m):
    return (v // m) * m


def _round_up(v, m):
    return ((v + m - 1) // m) * m


def _choose_tiles(N, C, HW, itemsize):
    """Pick (TN, TC, THW) so 2 * TN*TC*THW*itemsize fits the VMEM budget.

    Legality rules for the (TN, TC, THW) input block and (TN, TC) output block:
      TN  : multiple of 8   or == N
      TC  : multiple of 128 or == C   (TC is the output lane dim)
      THW : multiple of 128 or == HW
    """
    budget = _INPUT_VMEM_BUDGET_BYTES

    def fits(tn, tc, thw):
        return 2 * tn * tc * thw * itemsize <= budget

    tn, tc, thw = N, C, HW

    # 1) Shrink the batch tile first (rows are fully independent).
    if not fits(tn, tc, thw) and N >= 8:
        rows = budget // (2 * tc * thw * itemsize)
        tn = min(N, max(8, _round_down(rows, 8)))

    # 2) Then the channel tile (multiples of 128 keep output stores unmasked).
    if not fits(tn, tc, thw) and C > 128:
        cols = budget // (2 * tn * thw * itemsize)
        tc = min(C, max(128, _round_down(cols, 128)))

    # 3) Finally chunk the spatial reduction axis ('arbitrary' grid axis).
    if not fits(tn, tc, thw) and HW > 128:
        lanes = budget // (2 * tn * tc * itemsize)
        thw = min(HW, max(128, _round_down(lanes, 128)))

    # v7x has 2 TensorCores: give the 'parallel' axes >= 2 grid steps when a
    # legal split exists.  (Splitting only shrinks tiles, budget still holds.)
    if pl.cdiv(N, tn) * pl.cdiv(C, tc) < 2:
        if N >= 16:
            tn = min(tn, _round_up(pl.cdiv(N, 2), 8))
        elif C >= 256:
            tc = min(tc, _round_up(pl.cdiv(C, 2), 128))

    return tn, tc, thw


def _make_head_kernel(hw_total, thw, need_mask):
    def head_kernel(x_ref, sb_ref, o_ref, acc_ref):
        # x_ref:   (TN, TC, THW)  NCHW block, spatial (HW) on the lane axis
        # sb_ref:  (2, TC)  row 0 = scale = gamma*rsqrt(var+eps)/HW
        #                   row 1 = bias  = beta - mean*gamma*rsqrt(var+eps)
        # o_ref:   (TN, TC)
        # acc_ref: (TN, TC) f32 partial spatial sums (resident across k axis)
        k = pl.program_id(2)

        @pl.when(k == 0)
        def _init():
            acc_ref[...] = jnp.zeros_like(acc_ref)

        x = x_ref[...]
        if need_mask:
            # Zero the spatial padding of the (possibly partial) last HW chunk.
            pos = jax.lax.broadcasted_iota(jnp.int32, x.shape, 2) + k * thw
            x = jnp.where(pos < hw_total, x, jnp.zeros_like(x))

        # AdaptiveAvgPool2d(1) + Flatten: spatial sum, f32 accumulation
        # (the 1/HW mean factor is folded into `scale`).
        acc_ref[...] += jnp.sum(x, axis=-1, dtype=jnp.float32)

        @pl.when(k == pl.num_programs(2) - 1)
        def _finish():
            # Folded eval-mode BatchNorm1d; Dropout(0.75) is identity at inference.
            # TODO(synk): training-mode dropout (prng mask + 1/(1-p)) not implemented.
            o_ref[...] = (acc_ref[...] * sb_ref[0:1, :]
                          + sb_ref[1:2, :]).astype(o_ref.dtype)

    return head_kernel


def head_forward(x, gamma, beta, running_mean, running_var, eps=EPS):
    """x: (N, C, H, W) float32/bf16 -> (N, C) float32."""
    N, C, H, W = x.shape
    HW = H * W

    # Free reshape only (no HBM transpose): reduce over the last axis in-kernel.
    x_flat = x.reshape(N, C, HW)

    # Fold BN affine + 1/HW into a single per-channel (2, C) scale/bias slab.
    inv_std = jax.lax.rsqrt(running_var.astype(jnp.float32) + eps)
    g = gamma.astype(jnp.float32)
    scale = g * inv_std / HW
    bias = beta.astype(jnp.float32) - running_mean.astype(jnp.float32) * g * inv_std
    scale_bias = jnp.stack([scale, bias], axis=0)                  # (2, C)

    TN, TC, THW = _choose_tiles(N, C, HW, x_flat.dtype.itemsize)
    grid = (pl.cdiv(N, TN), pl.cdiv(C, TC), pl.cdiv(HW, THW))
    need_mask = (grid[2] > 1) and (HW % THW != 0)

    cost = pl.CostEstimate(
        flops=N * C * HW + 2 * N * C,
        transcendentals=0,
        bytes_accessed=x_flat.size * x_flat.dtype.itemsize + N * C * 4 + 2 * C * 4,
    )

    return pl.pallas_call(
        _make_head_kernel(HW, THW, need_mask),
        out_shape=jax.ShapeDtypeStruct((N, C), jnp.float32),
        grid=grid,
        in_specs=[
            pl.BlockSpec((TN, TC, THW), lambda i, j, k: (i, j, k)),
            pl.BlockSpec((2, TC), lambda i, j, k: (0, j)),
        ],
        out_specs=pl.BlockSpec((TN, TC), lambda i, j, k: (i, j)),
        scratch_shapes=[pltpu.VMEM((TN, TC), jnp.float32)],
        compiler_params=pltpu.CompilerParams(
            dimension_semantics=("parallel", "parallel", "arbitrary"),
            vmem_limit_bytes=_VMEM_LIMIT_BYTES,
        ),
        cost_estimate=cost,
    )(x_flat, scale_bias)


if __name__ == "__main__":
    key = jax.random.PRNGKey(0)
    k_x, k_g, k_b, k_m, k_v = jax.random.split(key, 5)

    N, C, H, W = 2, 4, 16, 16
    x = jax.random.normal(k_x, (N, C, H, W), dtype=jnp.float32)

    # Deterministic BatchNorm1d parameters / running stats (synthetic).
    gamma = 1.0 + 0.1 * jax.random.normal(k_g, (C,), dtype=jnp.float32)
    beta = 0.1 * jax.random.normal(k_b, (C,), dtype=jnp.float32)
    running_mean = 0.1 * jax.random.normal(k_m, (C,), dtype=jnp.float32)
    running_var = jnp.abs(1.0 + 0.1 * jax.random.normal(k_v, (C,), dtype=jnp.float32))

    out = head_forward(x, gamma, beta, running_mean, running_var)
    out = jax.block_until_ready(out)

    # Pure-JAX reference for sanity.
    pooled_ref = jnp.mean(x, axis=(2, 3))
    ref = (pooled_ref - running_mean) * jax.lax.rsqrt(running_var + EPS) * gamma + beta
    assert out.shape == (N, C)
    assert jnp.allclose(out, ref, atol=1e-5, rtol=1e-5), "mismatch vs reference"

    print("KERNEL_OK")
</pallas_src>

<mosaic_0001>
module attributes {stable_mosaic.version = 11 : i64} {
  func.func @head_kernel(%arg0: i32, %arg1: i32, %arg2: i32, %arg3: memref<2x4x256xf32, #tpu.memory_space<vmem>>, %arg4: memref<2x4xf32, #tpu.memory_space<vmem>>, %arg5: memref<2x4xf32, #tpu.memory_space<vmem>>, %arg6: memref<2x4xf32, #tpu.memory_space<vmem>>) attributes {dimension_semantics = [#tpu.dimension_semantics<parallel>, #tpu.dimension_semantics<parallel>, #tpu.dimension_semantics<arbitrary>], iteration_bounds = array<i64: 1, 1, 1>, scalar_prefetch = 0 : i64, scratch_operands = 1 : i64, tpu.core_type = #tpu.core_type<tc>, window_params = [{transform_indices = @transform_0, window_bounds = array<i64: 2, 4, 256>}, {transform_indices = @transform_1, window_bounds = array<i64: 2, 4>}, {transform_indices = @transform_2, window_bounds = array<i64: 2, 4>}]} {
    %c0_i32 = arith.constant 0 : i32
    %0 = arith.cmpi eq, %arg2, %c0_i32 : i32
    %1 = arith.extui %0 : i1 to i32
    %c0_i32_0 = arith.constant 0 : i32
    %2 = arith.cmpi ne, %1, %c0_i32_0 : i32
    scf.if %2 {
      %cst_9 = arith.constant 0.000000e+00 : f32
      %11 = vector.broadcast %cst_9 : f32 to vector<2x4xf32>
      %c0_10 = arith.constant 0 : index
      %c0_11 = arith.constant 0 : index
      %12 = vector.load %arg6[%c0_10, %c0_11] : memref<2x4xf32, #tpu.memory_space<vmem>>, vector<2x4xf32>
      tpu.vector_store %arg6[%c0_10, %c0_11], %11 {strides = array<i32>} : memref<2x4xf32, #tpu.memory_space<vmem>>, vector<2x4xf32>,
    } else {
    }
    %c0 = arith.constant 0 : index
    %c0_1 = arith.constant 0 : index
    %c0_2 = arith.constant 0 : index
    %3 = vector.load %arg3[%c0, %c0_1, %c0_2] : memref<2x4x256xf32, #tpu.memory_space<vmem>>, vector<2x4x256xf32>
    %c0_3 = arith.constant 0 : index
    %c0_4 = arith.constant 0 : index
    %4 = vector.load %arg6[%c0_3, %c0_4] : memref<2x4xf32, #tpu.memory_space<vmem>>, vector<2x4xf32>
    %cst = arith.constant dense<0.000000e+00> : vector<2x4xf32>
    %5 = vector.multi_reduction <add>, %3, %cst [2] : vector<2x4x256xf32> to vector<2x4xf32>
    %6 = arith.addf %4, %5 : vector<2x4xf32>
    %c0_5 = arith.constant 0 : index
    %c0_6 = arith.constant 0 : index
    %7 = vector.load %arg6[%c0_5, %c0_6] : memref<2x4xf32, #tpu.memory_space<vmem>>, vector<2x4xf32>
    tpu.vector_store %arg6[%c0_5, %c0_6], %6 {strides = array<i32>} : memref<2x4xf32, #tpu.memory_space<vmem>>, vector<2x4xf32>,
    %c0_i32_7 = arith.constant 0 : i32
    %8 = arith.cmpi eq, %arg2, %c0_i32_7 : i32
    %9 = arith.extui %8 : i1 to i32
    %c0_i32_8 = arith.constant 0 : i32
    %10 = arith.cmpi ne, %9, %c0_i32_8 : i32
    scf.if %10 {
      %c0_9 = arith.constant 0 : index
      %c0_10 = arith.constant 0 : index
      %11 = vector.load %arg6[%c0_9, %c0_10] : memref<2x4xf32, #tpu.memory_space<vmem>>, vector<2x4xf32>
      %c0_11 = arith.constant 0 : index
      %c0_12 = arith.constant 0 : index
      %12 = vector.load %arg4[%c0_11, %c0_12] : memref<2x4xf32, #tpu.memory_space<vmem>>, vector<1x4xf32>
      %13 = vector.broadcast %12 : vector<1x4xf32> to vector<2x4xf32>
      %14 = arith.mulf %11, %13 : vector<2x4xf32>
      %c1 = arith.constant 1 : index
      %c0_13 = arith.constant 0 : index
      %15 = vector.load %arg4[%c1, %c0_13] : memref<2x4xf32, #tpu.memory_space<vmem>>, vector<1x4xf32>
      %16 = vector.broadcast %15 : vector<1x4xf32> to vector<2x4xf32>
      %17 = arith.addf %14, %16 : vector<2x4xf32>
      %c0_14 = arith.constant 0 : index
      %c0_15 = arith.constant 0 : index
      %18 = vector.load %arg5[%c0_14, %c0_15] : memref<2x4xf32, #tpu.memory_space<vmem>>, vector<2x4xf32>
      tpu.vector_store %arg5[%c0_14, %c0_15], %17 {strides = array<i32>} : memref<2x4xf32, #tpu.memory_space<vmem>>, vector<2x4xf32>,
    } else {
    }
    return
  }
  func.func @transform_0(%arg0: i32, %arg1: i32, %arg2: i32) -> (i32, i32, i32) {
    %c0_i32 = arith.constant 0 : i32
    return %arg0, %arg1, %arg2 : i32, i32, i32
  }
  func.func @transform_1(%arg0: i32, %arg1: i32, %arg2: i32) -> (i32, i32) {
    %c0_i32 = arith.constant 0 : i32
    %c0_i32_0 = arith.constant 0 : i32
    return %c0_i32, %arg1 : i32, i32
  }
  func.func @transform_2(%arg0: i32, %arg1: i32, %arg2: i32) -> (i32, i32) {
    %c0_i32 = arith.constant 0 : i32
    return %arg0, %arg1 : i32, i32
  }
}

</mosaic_0001>

<llo_original>
// kernel: tpu_custom_call.1
$region0: #{tpu_custom_call.1}
  #allocation0 [shape = 'u32[]', space=smem, size = 0x4, offset = 0x4, fixed_abs, tag = 'smem constant byte address 0x4 - core index']
  #allocation1 [shape = 'u32[144,128]{1,0:T(1,128)}', space=vmem, size = 0x12000, scoped, tag = 'internal scratch']
  #allocation2 [shape = 'f32[2,4]{1,0:T(2,128)}', space=vmem, size = 0x400, scoped, tag = 'scratch operand']
  %s0 = inlined_call_operand.hbm [shape: f32[2,4,256], index: 0, kind: input, shape index: {}]
  %s1 = inlined_call_operand.vmem [shape: f32[2,4], index: 1, kind: input, shape index: {}]
  %s2 = inlined_call_operand.hbm [shape: f32[2,4], index: 2, kind: output, shape index: {}]
  %s3 = sld [smem:[#allocation0]]
  $region30: #{tpu_custom_call.1} parent=0
    _
  %s5 = ssub.s32 1, %s3
  %s6 = scalar_select 0, %s5, %s3
  $region1: #{tpu_custom_call.1} parent=0
    #allocation3 [shape = 'u8[8192]{0}', space=vmem, size = 0x2000, scoped, tag = 'input window, operand 0, single buffered']
    #allocation4 [shape = 's32[1]{0}', space=sflag, size = 0x4, scoped, tag = 'scoped memory for tpu_custom_call.1']
    #allocation5 [shape = 's32[1]{0}', space=sflag, size = 0x4, scoped, tag = 'scoped memory for tpu_custom_call.1']
    #allocation6 [shape = 'u8[1024]{0}', space=vmem, size = 0x400, scoped, tag = 'output window, operand 0, single buffered']
    %7 = vsyncpa [#allocation4], 0
    %8 = vsyncpa [#allocation5], 0
    // Predicated region
    $region2: #{tpu_custom_call.1} parent=1 // pred_check
      _
    $region3: #{tpu_custom_call.1} parent=1 // pred_check_branch
      %10 = sbr.rel (0) target = $region5
    $region4: #{tpu_custom_call.1} parent=1 // pred_region
      %s12 = ssub.s32 256, 256
      %13 = vsyncadd [#allocation4], %s12
      %s14 = sshll.u32 [#allocation3], 4
      %s15 = int_to_ptr.vmem [resolvable:$true] %s14
      %20 = dma.hbm_to_vmem [thread:$0]  %s0, 256, %s15, [#allocation4], 128, 128, 8
    $region5: #{tpu_custom_call.1} parent=1 // pred_fallthru
      _
    // Predicated region
    $region6: #{tpu_custom_call.1} parent=1 // pred_check
      _
    $region7: #{tpu_custom_call.1} parent=1 // pred_check_branch
      %22 = sbr.rel (0) target = $region9
    $region8: #{tpu_custom_call.1} parent=1 // pred_region
      _
    $region9: #{tpu_custom_call.1} parent=1 // pred_fallthru
      _
    // Predicated region
    $region10: #{tpu_custom_call.1} parent=1 // pred_check
      _
    $region11: #{tpu_custom_call.1} parent=1 // pred_check_branch
      %24 = sbr.rel (0) target = $region13
    $region12: #{tpu_custom_call.1} parent=1 // pred_region
      %25 = dma.done [#allocation4], 256
    $region13: #{tpu_custom_call.1} parent=1 // pred_fallthru
      _
    %p26 = scmp.eq.s32.totalorder 0, 0
    // Predicated region
    $region14: #{tpu_custom_call.1} parent=1 // pred_check
      %p27 = pneg %p26
    $region15: #{tpu_custom_call.1} parent=1 // pred_check_branch
      %29 = sbr.rel (%p27) target = $region17
    $region16: #{tpu_custom_call.1} parent=1 // pred_region
      %vm30 = vcmask 25600
      %31 = vst.msk [vmem:[#allocation2] sm:$0x3] %vm30, 0.0
    $region17: #{tpu_custom_call.1} parent=1 // pred_fallthru
      _
    %v32 = vld [vmem:[#allocation3] sm:$0xff]
    %v33 = vld [vmem:[#allocation3 + $0x8] sm:$0xff]
    %v34 = vld [vmem:[#allocation2] sm:$0x3]
    %v37 = vcombine.high %v32, %v32
    %v38 = vcombine.high %v33, %v33
    %vm41 = vcmask 1043456
    %v42 = vsel %vm41, %v32, 0.0
    %v43 = vsel %vm41, %v37, 0.0
    %v44 = vadd.f32 %v42, %v43
    %45 = vadd.xlane.f32.xlu0 %v44
    %v46 = vpop.xlane.xlu0 %45
    %v47 = vsel %vm41, %v33, 0.0
    %v48 = vsel %vm41, %v38, 0.0
    %v49 = vadd.f32 %v47, %v48
    %50 = vadd.xlane.f32.xlu0 %v49
    %v51 = vpop.xlane.xlu0 %50
    %v54 = vlaneseq
    %v55 = vand.u32 %v54, 127
    %v56 = vlaneseq
    %v57 = vshrl.u32 %v56, 7
    %v58 = vsub.s32 %v55, %v57
    %v59 = vrot.slane %v46, %v58
    %v60 = vlaneseq
    %v61 = vshrl.u32 %v60, 7
    %v62 = vsub.s32 %v55, %v61
    %v63 = vrot.slane %v51, %v62
    %vm64 = vcmask 1041409
    %v65 = vsel %vm64, %v63, %v59
    %v67 = vadd.f32 %v34, %v65
    %vm68 = vcmask 25600
    %69 = vst.msk [vmem:[#allocation2] sm:$0x3] %vm68, %v67
    // Predicated region
    $region18: #{tpu_custom_call.1} parent=1 // pred_check
      %p70 = pneg %p26
    $region19: #{tpu_custom_call.1} parent=1 // pred_check_branch
      %72 = sbr.rel (%p70) target = $region21
    $region20: #{tpu_custom_call.1} parent=1 // pred_region
      %v73 = vld [vmem:[#allocation2] sm:$0x3]
      %v74 = vld [vmem:[%s1] sm:$0x1]
      %v75 = vlaneseq
      %v76 = vshrl.u32 %v75, 7
      %v77 = vsub.s32 0, %v76
      %v78 = vrot.slane %v74, %v77
      %v79 = vmul.f32 %v73, %v78
      %v80 = vld [vmem:[%s1 + $0x1] sm:$0x1]
      %v81 = vlaneseq
      %v82 = vshrl.u32 %v81, 7
      %v83 = vsub.s32 0, %v82
      %v84 = vrot.slane %v80, %v83
      %v85 = vadd.f32 %v79, %v84
      %86 = vst.msk [vmem:[#allocation6] sm:$0x3] %vm68, %v85
    $region21: #{tpu_custom_call.1} parent=1 // pred_fallthru
      _
    // Predicated region
    $region22: #{tpu_custom_call.1} parent=1 // pred_check
      _
    $region23: #{tpu_custom_call.1} parent=1 // pred_check_branch
      %88 = sbr.rel (0) target = $region25
    $region24: #{tpu_custom_call.1} parent=1 // pred_region
      %s90 = ssub.s32 32, 32
      %91 = vsyncadd [#allocation5], %s90
      %s93 = sshll.u32 [#allocation6], 4
      %s94 = int_to_ptr.vmem [resolvable:$true] %s93
      %96 = dma.vmem_to_hbm [thread:$0]  %s94, 32, %s2, [#allocation5]
    $region25: #{tpu_custom_call.1} parent=1 // pred_fallthru
      _
    // Predicated region
    $region26: #{tpu_custom_call.1} parent=1 // pred_check
      _
    $region27: #{tpu_custom_call.1} parent=1 // pred_check_branch
      %98 = sbr.rel (0) target = $region29
    $region28: #{tpu_custom_call.1} parent=1 // pred_region
      %99 = dma.done [#allocation5], 32
    $region29: #{tpu_custom_call.1} parent=1 // pred_fallthru
      _
    %100 = vsyncpa [#allocation4], 1
    %101 = vsyncpa [#allocation5], 1

</llo_original>
